<compile_context>
chip_gen: v7x
topology: tpu7x:2x2x1
jax: 0.10.0
libtpu: 0.0.40
codegen_flags: <defaults>
</compile_context>

<pallas_src>
import functools

import jax
import jax.numpy as jnp
from jax.experimental import pallas as pl
from jax.experimental.pallas import tpu as pltpu


def _ffn_kernel(x_ref, w1_ref, b1_ref, w2_ref, shift_ref, o_ref):
    # x_ref: (Cin, TS)   w1_ref: (Cout, Cin)   b1_ref: (Cout, 1)
    # w2_ref: (Cin, Cout) [BN-scaled]   shift_ref: (Cin, 1)   o_ref: (Cin, TS)
    x = x_ref[...]

    # fc1 (1x1 conv over channels) + bias + ReLU; native-dtype MXU, f32 accumulate.
    h = jnp.dot(w1_ref[...], x, preferred_element_type=jnp.float32)
    h = jnp.maximum(h + b1_ref[...], 0.0)

    # fc2 with BatchNorm folded into the weight, then folded shift + residual.
    y = jnp.dot(w2_ref[...], h.astype(w2_ref.dtype),
                preferred_element_type=jnp.float32)
    y = y + shift_ref[...] + x.astype(jnp.float32)
    o_ref[...] = y.astype(o_ref.dtype)


def _pick_spatial_tile(hw, cin, cout, itemsize, *, max_ts=4096,
                       vmem_budget=12 * 1024 * 1024):
    """Pick a lane-dense (multiple-of-128) spatial tile.

    Sized so the per-step working set (double-buffered x + out tiles plus the
    f32 hidden tile) stays inside a conservative VMEM budget (valid on v7x's
    64 MiB/TC as well), preferring a tile that divides hw exactly so the
    padding fallback (an extra HBM pass) is avoided whenever possible.
    """
    hw128 = pl.cdiv(hw, 128) * 128
    per_col = 2 * 2 * cin * itemsize + cout * 4      # x+out dbl-buffered, f32 hidden
    fit = (vmem_budget // max(per_col, 1)) // 128 * 128
    ts = max(128, min(max_ts, hw128, fit) // 128 * 128)
    if hw % ts != 0:
        for cand in range(ts, 0, -128):
            if hw % cand == 0:
                return cand
    return ts


@functools.partial(jax.jit, static_argnames=("eps",))
def feed_forward_layer(x_nchw, w1, b1, w2, b2, gamma, beta,
                       running_mean, running_var, eps=1e-5):
    """Fused FFN block (eval mode).

    x_nchw: (N, Cin, H, W)
    w1: (Cout, Cin)  b1: (Cout,)   -- fc1 = Conv2d(Cin, Cout, 1x1)
    w2: (Cin, Cout)  b2: (Cin,)    -- fc2 = Conv2d(Cout, Cin, 1x1)
    gamma/beta/running_mean/running_var: (Cin,) -- BatchNorm2d(Cin), eval.
    """
    N, Cin, H, W = x_nchw.shape
    Cout = w1.shape[0]
    hw = H * W
    itemsize = jnp.dtype(x_nchw.dtype).itemsize

    # Fold BatchNorm (eval) + fc2 bias into fc2's weight and one shift vector.
    bn_scale = gamma / jnp.sqrt(running_var + eps)            # (Cin,)
    bn_shift = beta - running_mean * bn_scale                 # (Cin,)
    w2f = (bn_scale[:, None] * w2).astype(x_nchw.dtype)       # (Cin, Cout)
    shift = (bn_scale * b2 + bn_shift).astype(jnp.float32)    # (Cin,)

    w1c = w1.astype(x_nchw.dtype)
    b1c = b1.astype(jnp.float32).reshape(Cout, 1)
    shiftc = shift.reshape(Cin, 1)

    # Channels-first, spatial on the lane axis (free reshape, no transpose).
    x3 = x_nchw.reshape(N, Cin, hw)

    ts_eff = _pick_spatial_tile(hw, Cin, Cout, itemsize)
    hw_pad = pl.cdiv(hw, ts_eff) * ts_eff
    if hw_pad != hw:
        # Fallback only when hw has no lane-dense divisor; costs one HBM pass.
        x3 = jnp.pad(x3, ((0, 0), (0, 0), (0, hw_pad - hw)))

    n_spatial = hw_pad // ts_eff
    grid = (N, n_spatial)

    # VMEM budget: double-buffered x/out tiles + f32 hidden tile + resident
    # weights, with 2x headroom; clamped to stay valid on v7x (64 MiB/TC) and
    # above v5e's small scoped default.
    est = 2 * 2 * Cin * ts_eff * itemsize             # x + out, double-buffered
    est += Cout * ts_eff * 4                          # f32 hidden tile
    est += 2 * (Cout * Cin + Cin * Cout) * itemsize   # resident weight buffers
    est += 2 * (Cout + Cin) * 4                       # biases / shift
    vmem_limit = int(min(56 * 1024 * 1024, max(32 * 1024 * 1024, 2 * est)))

    # Advisory cost hint for XLA's scheduler around the custom call.
    flops = 4 * N * hw_pad * Cin * Cout               # two matmuls, 2*M*N*K each
    bytes_accessed = (2 * N * Cin * hw_pad + 2 * Cin * Cout) * itemsize
    cost = pl.CostEstimate(flops=flops, transcendentals=0,
                           bytes_accessed=bytes_accessed)

    out3 = pl.pallas_call(
        _ffn_kernel,
        out_shape=jax.ShapeDtypeStruct((N, Cin, hw_pad), x_nchw.dtype),
        grid_spec=pltpu.PrefetchScalarGridSpec(
            num_scalar_prefetch=0,
            grid=grid,
            in_specs=[
                pl.BlockSpec((None, Cin, ts_eff), lambda n, s: (n, 0, s)),  # x
                pl.BlockSpec((Cout, Cin), lambda n, s: (0, 0)),   # w1 (resident)
                pl.BlockSpec((Cout, 1), lambda n, s: (0, 0)),     # b1
                pl.BlockSpec((Cin, Cout), lambda n, s: (0, 0)),   # w2 * bn_scale
                pl.BlockSpec((Cin, 1), lambda n, s: (0, 0)),      # folded shift
            ],
            out_specs=pl.BlockSpec((None, Cin, ts_eff), lambda n, s: (n, 0, s)),
        ),
        compiler_params=pltpu.CompilerParams(
            dimension_semantics=("parallel", "parallel"),
            vmem_limit_bytes=vmem_limit,
        ),
        cost_estimate=cost,
    )(x3, w1c, b1c, w2f, shiftc)

    if hw_pad != hw:
        out3 = out3[:, :, :hw]
    return out3.reshape(N, Cin, H, W)


def _reference(x, w1, b1, w2, b2, gamma, beta, mean, var, eps=1e-5):
    h = jnp.einsum("fc,nchw->nfhw", w1, x) + b1[None, :, None, None]
    h = jnp.maximum(h, 0.0)
    y = jnp.einsum("cf,nfhw->nchw", w2, h) + b2[None, :, None, None]
    inv = gamma / jnp.sqrt(var + eps)
    y = (y - mean[None, :, None, None]) * inv[None, :, None, None] \
        + beta[None, :, None, None]
    return y + x


if __name__ == "__main__":
    key = jax.random.PRNGKey(0)
    N, Cin, H, W = 2, 4, 16, 16
    Cout = 32  # hidden width (out_feat)

    ks = jax.random.split(key, 9)
    x = jax.random.normal(ks[0], (N, Cin, H, W), dtype=jnp.float32)

    # PyTorch Conv2d(Cin, Cout, 1x1).weight has shape (Cout, Cin, 1, 1) -> (Cout, Cin)
    w1 = jax.random.normal(ks[1], (Cout, Cin), dtype=jnp.float32) * 0.1
    b1 = jax.random.normal(ks[2], (Cout,), dtype=jnp.float32) * 0.1
    # Conv2d(Cout, Cin, 1x1).weight -> (Cin, Cout)
    w2 = jax.random.normal(ks[3], (Cin, Cout), dtype=jnp.float32) * 0.1
    b2 = jax.random.normal(ks[4], (Cin,), dtype=jnp.float32) * 0.1

    # BatchNorm2d(Cin) eval-mode parameters.
    gamma = 1.0 + 0.1 * jax.random.normal(ks[5], (Cin,), dtype=jnp.float32)
    beta = 0.1 * jax.random.normal(ks[6], (Cin,), dtype=jnp.float32)
    running_mean = 0.1 * jax.random.normal(ks[7], (Cin,), dtype=jnp.float32)
    running_var = 1.0 + 0.1 * jax.random.uniform(ks[8], (Cin,), dtype=jnp.float32)

    out = feed_forward_layer(x, w1, b1, w2, b2, gamma, beta,
                             running_mean, running_var)
    out = jax.block_until_ready(out)

    ref = _reference(x, w1, b1, w2, b2, gamma, beta, running_mean, running_var)
    assert out.shape == x.shape and out.dtype == x.dtype
    assert jnp.allclose(out, ref, atol=1e-5, rtol=1e-5), "mismatch vs reference"

    print("KERNEL_OK")
</pallas_src>

<mosaic_0001>
module attributes {stable_mosaic.version = 11 : i64} {
  func.func @_ffn_kernel(%arg0: i32, %arg1: i32, %arg2: memref<1x4x256xf32, #tpu.memory_space<vmem>>, %arg3: memref<32x4xf32, #tpu.memory_space<vmem>>, %arg4: memref<32x1xf32, #tpu.memory_space<vmem>>, %arg5: memref<4x32xf32, #tpu.memory_space<vmem>>, %arg6: memref<4x1xf32, #tpu.memory_space<vmem>>, %arg7: memref<1x4x256xf32, #tpu.memory_space<vmem>>) attributes {dimension_semantics = [#tpu.dimension_semantics<parallel>, #tpu.dimension_semantics<parallel>], iteration_bounds = array<i64: 2, 1>, scalar_prefetch = 0 : i64, scratch_operands = 0 : i64, tpu.core_type = #tpu.core_type<tc>, window_params = [{transform_indices = @transform_0, window_bounds = array<i64: 1, 4, 256>}, {pipeline_mode = #tpu.pipeline_mode<synchronous>, transform_indices = @transform_1, window_bounds = array<i64: 32, 4>}, {pipeline_mode = #tpu.pipeline_mode<synchronous>, transform_indices = @transform_2, window_bounds = array<i64: 32, 1>}, {pipeline_mode = #tpu.pipeline_mode<synchronous>, transform_indices = @transform_3, window_bounds = array<i64: 4, 32>}, {pipeline_mode = #tpu.pipeline_mode<synchronous>, transform_indices = @transform_4, window_bounds = array<i64: 4, 1>}, {transform_indices = @transform_5, window_bounds = array<i64: 1, 4, 256>}]} {
    %c0 = arith.constant 0 : index
    %c0_0 = arith.constant 0 : index
    %c0_1 = arith.constant 0 : index
    %0 = vector.load %arg2[%c0, %c0_0, %c0_1] : memref<1x4x256xf32, #tpu.memory_space<vmem>>, vector<1x4x256xf32>
    %1 = vector.shape_cast %0 : vector<1x4x256xf32> to vector<4x256xf32>
    %c0_2 = arith.constant 0 : index
    %c0_3 = arith.constant 0 : index
    %2 = vector.load %arg3[%c0_2, %c0_3] : memref<32x4xf32, #tpu.memory_space<vmem>>, vector<32x4xf32>
    %cst = arith.constant dense<0.000000e+00> : vector<32x256xf32>
    %3 = tpu.matmul %2, %1, %cst {dimension_numbers = #tpu.dot_dimension_numbers<[1], [0], [0], [1], [0, 0, 1, 1], [], []>} : vector<32x4xf32>, vector<4x256xf32>, vector<32x256xf32> -> vector<32x256xf32>
    %c0_4 = arith.constant 0 : index
    %c0_5 = arith.constant 0 : index
    %4 = vector.load %arg4[%c0_4, %c0_5] : memref<32x1xf32, #tpu.memory_space<vmem>>, vector<32x1xf32>
    %5 = vector.broadcast %4 : vector<32x1xf32> to vector<32x256xf32>
    %6 = arith.addf %3, %5 : vector<32x256xf32>
    %cst_6 = arith.constant 0.000000e+00 : f32
    %7 = vector.broadcast %cst_6 : f32 to vector<32x256xf32>
    %8 = arith.maximumf %6, %7 : vector<32x256xf32>
    %c0_7 = arith.constant 0 : index
    %c0_8 = arith.constant 0 : index
    %9 = vector.load %arg5[%c0_7, %c0_8] : memref<4x32xf32, #tpu.memory_space<vmem>>, vector<4x32xf32>
    %cst_9 = arith.constant dense<0.000000e+00> : vector<4x256xf32>
    %10 = tpu.matmul %9, %8, %cst_9 {dimension_numbers = #tpu.dot_dimension_numbers<[1], [0], [0], [1], [0, 0, 1, 1], [], []>} : vector<4x32xf32>, vector<32x256xf32>, vector<4x256xf32> -> vector<4x256xf32>
    %c0_10 = arith.constant 0 : index
    %c0_11 = arith.constant 0 : index
    %11 = vector.load %arg6[%c0_10, %c0_11] : memref<4x1xf32, #tpu.memory_space<vmem>>, vector<4x1xf32>
    %12 = vector.broadcast %11 : vector<4x1xf32> to vector<4x256xf32>
    %13 = arith.addf %10, %12 : vector<4x256xf32>
    %14 = arith.addf %13, %1 : vector<4x256xf32>
    %c0_12 = arith.constant 0 : index
    %c0_13 = arith.constant 0 : index
    %c0_14 = arith.constant 0 : index
    %15 = vector.load %arg7[%c0_12, %c0_13, %c0_14] : memref<1x4x256xf32, #tpu.memory_space<vmem>>, vector<1x4x256xf32>
    %16 = vector.shape_cast %15 : vector<1x4x256xf32> to vector<4x256xf32>
    %17 = vector.shape_cast %14 : vector<4x256xf32> to vector<1x4x256xf32>
    tpu.vector_store %arg7[%c0_12, %c0_13, %c0_14], %17 {strides = array<i32>} : memref<1x4x256xf32, #tpu.memory_space<vmem>>, vector<1x4x256xf32>,
    return
  }
  func.func @transform_0(%arg0: i32, %arg1: i32) -> (i32, i32, i32) {
    %c0_i32 = arith.constant 0 : i32
    %c0_i32_0 = arith.constant 0 : i32
    return %arg0, %c0_i32, %arg1 : i32, i32, i32
  }
  func.func @transform_1(%arg0: i32, %arg1: i32) -> (i32, i32) {
    %c0_i32 = arith.constant 0 : i32
    %c0_i32_0 = arith.constant 0 : i32
    %c0_i32_1 = arith.constant 0 : i32
    return %c0_i32, %c0_i32_0 : i32, i32
  }
  func.func @transform_2(%arg0: i32, %arg1: i32) -> (i32, i32) {
    %c0_i32 = arith.constant 0 : i32
    %c0_i32_0 = arith.constant 0 : i32
    %c0_i32_1 = arith.constant 0 : i32
    return %c0_i32, %c0_i32_0 : i32, i32
  }
  func.func @transform_3(%arg0: i32, %arg1: i32) -> (i32, i32) {
    %c0_i32 = arith.constant 0 : i32
    %c0_i32_0 = arith.constant 0 : i32
    %c0_i32_1 = arith.constant 0 : i32
    return %c0_i32, %c0_i32_0 : i32, i32
  }
  func.func @transform_4(%arg0: i32, %arg1: i32) -> (i32, i32) {
    %c0_i32 = arith.constant 0 : i32
    %c0_i32_0 = arith.constant 0 : i32
    %c0_i32_1 = arith.constant 0 : i32
    return %c0_i32, %c0_i32_0 : i32, i32
  }
  func.func @transform_5(%arg0: i32, %arg1: i32) -> (i32, i32, i32) {
    %c0_i32 = arith.constant 0 : i32
    %c0_i32_0 = arith.constant 0 : i32
    return %arg0, %c0_i32, %arg1 : i32, i32, i32
  }
}

</mosaic_0001>

<llo_original>
// kernel: feed_forward_layer.1
$region0: #{feed_forward_layer.1}
  #allocation0 [shape = 'u32[]', space=smem, size = 0x4, offset = 0x4, fixed_abs, tag = 'smem constant byte address 0x4 - core index']
  #allocation1 [shape = 'u32[144,128]{1,0:T(1,128)}', space=vmem, size = 0x12000, scoped, tag = 'internal scratch']
  %s0 = inlined_call_operand.vmem [shape: f32[2,4,256], index: 0, kind: input, shape index: {}]
  %s1 = inlined_call_operand.vmem [shape: f32[32,4], index: 1, kind: input, shape index: {}]
  %s2 = inlined_call_operand.vmem [shape: f32[32,1], index: 2, kind: input, shape index: {}]
  %s3 = inlined_call_operand.vmem [shape: f32[4,32], index: 3, kind: input, shape index: {}]
  %s4 = inlined_call_operand.vmem [shape: f32[4,1], index: 4, kind: input, shape index: {}]
  %s5 = inlined_call_operand.vmem [shape: f32[2,4,256], index: 5, kind: output, shape index: {}]
  %s6 = sld [smem:[#allocation0]]
  $region53: #{feed_forward_layer.1} parent=0
    _
  %s8 = ssub.s32 1, %s6
  %s9 = scalar_select 0, %s8, %s6
  loop: start=0, step=1, limit=4
  $region2: #{feed_forward_layer.1} parent=0 // loop_pre_header
    _
  $region3: #{feed_forward_layer.1} parent=0 // loop_header
    %s11 = sphi 0, %s15
    %p12 = scmp.ge.s32.totalorder %s11, 4
    %s18 = sphi 0, %s30
    %s19 = sphi 0, %s26
    %s20 = sphi 0, %s18
    %s21 = sphi 0, %s19
    %s22 = sphi 0, %s20
    %s23 = sphi 0, %s21
    %s35 = sphi 0, %s37
    %s38 = sphi 0, %s35
    %s39 = sphi 0, %s38
    %s55 = sphi 0, %s39
    %s59 = sphi 0, %s59
    %s61 = sphi 0, %s59
    %s62 = sphi 0, %s61
    %s76 = sphi 0, %s62
    %s80 = sphi 0, %s80
    %s82 = sphi 0, %s80
    %s83 = sphi 0, %s82
    %s97 = sphi 0, %s83
    %s101 = sphi 0, %s101
    %s103 = sphi 0, %s101
    %s104 = sphi 0, %s103
    %s118 = sphi 0, %s104
    %s122 = sphi 0, %s122
    %s124 = sphi 0, %s122
    %s125 = sphi 0, %s124
    %s139 = sphi 0, %s125
    %s147 = sphi 0, %s149
    %s150 = sphi 0, %s147
    %s151 = sphi 0, %s150
    %s167 = sphi 0, %s151
  $region4: #{feed_forward_layer.1} parent=0 // loop_header_branch
    %14 = sbr.rel (%p12) target = $region8
  $region5: #{feed_forward_layer.1} parent=0 // loop_body
    %s16 = ssub.s32 %s11, 1
    %s17 = ssub.s32 %s11, 2
    %s24 = sadd.s32 1, %s19
    %p25 = scmp.ge.s32.totalorder %s24, 1
    %s26 = scalar_select %p25, 0, %s24
    %s27 = sadd.s32 1, %s18
    %s28 = scalar_select %p25, %s27, %s18
    %p29 = scmp.ge.s32.totalorder %s28, 2
    %s30 = scalar_select %p29, 0, %s28
    %s31 = ssub.s32 %s18, %s30
    %s32 = ssub.s32 %s19, %s26
    %s33 = sor.u32 %s31, %s32
    %p34 = scmp.eq.s32.totalorder %s33, 0
    %s36 = sadd.s32 %s35, 1
    %s37 = scalar_select %p34, %s35, %s36
    %p40 = pneg %p34
    %p41 = scmp.eq.s32.totalorder %s11, 1
    %p42 = por %p40, %p41
    %p43 = scmp.ne.s32.totalorder %s35, %s38
    %p44 = scmp.eq.s32.totalorder %s11, 0
    %p45 = por %p43, %p44
    %p46 = scmp.ne.s32.totalorder %s35, %s38
    %p47 = scmp.eq.s32.totalorder %s16, 1
    %p48 = por %p46, %p47
    %p49 = scmp.ne.s32.totalorder %s38, %s39
    %p50 = scmp.eq.s32.totalorder %s16, 0
    %p51 = por %p49, %p50
    %p52 = scmp.ne.s32.totalorder %s38, %s39
    %p53 = scmp.eq.s32.totalorder %s17, 1
    %p54 = por %p52, %p53
    %p56 = scmp.ne.s32.totalorder %s39, %s55
    %p57 = scmp.eq.s32.totalorder %s17, 0
    %p58 = por %p56, %p57
    %s60 = sadd.s32 %s59, 1
    %p63 = scmp.eq.s32.totalorder %s11, 1
    %p64 = scmp.ne.s32.totalorder %s59, %s61
    %p65 = scmp.eq.s32.totalorder %s11, 0
    %p66 = por %p64, %p65
    %p67 = scmp.ne.s32.totalorder %s59, %s61
    %p68 = scmp.eq.s32.totalorder %s16, 1
    %p69 = por %p67, %p68
    %p70 = scmp.ne.s32.totalorder %s61, %s62
    %p71 = scmp.eq.s32.totalorder %s16, 0
    %p72 = por %p70, %p71
    %p73 = scmp.ne.s32.totalorder %s61, %s62
    %p74 = scmp.eq.s32.totalorder %s17, 1
    %p75 = por %p73, %p74
    %p77 = scmp.ne.s32.totalorder %s62, %s76
    %p78 = scmp.eq.s32.totalorder %s17, 0
    %p79 = por %p77, %p78
    %s81 = sadd.s32 %s80, 1
    %p84 = scmp.eq.s32.totalorder %s11, 1
    %p85 = scmp.ne.s32.totalorder %s80, %s82
    %p86 = scmp.eq.s32.totalorder %s11, 0
    %p87 = por %p85, %p86
    %p88 = scmp.ne.s32.totalorder %s80, %s82
    %p89 = scmp.eq.s32.totalorder %s16, 1
    %p90 = por %p88, %p89
    %p91 = scmp.ne.s32.totalorder %s82, %s83
    %p92 = scmp.eq.s32.totalorder %s16, 0
    %p93 = por %p91, %p92
    %p94 = scmp.ne.s32.totalorder %s82, %s83
    %p95 = scmp.eq.s32.totalorder %s17, 1
    %p96 = por %p94, %p95
    %p98 = scmp.ne.s32.totalorder %s83, %s97
    %p99 = scmp.eq.s32.totalorder %s17, 0
    %p100 = por %p98, %p99
    %s102 = sadd.s32 %s101, 1
    %p105 = scmp.eq.s32.totalorder %s11, 1
    %p106 = scmp.ne.s32.totalorder %s101, %s103
    %p107 = scmp.eq.s32.totalorder %s11, 0
    %p108 = por %p106, %p107
    %p109 = scmp.ne.s32.totalorder %s101, %s103
    %p110 = scmp.eq.s32.totalorder %s16, 1
    %p111 = por %p109, %p110
    %p112 = scmp.ne.s32.totalorder %s103, %s104
    %p113 = scmp.eq.s32.totalorder %s16, 0
    %p114 = por %p112, %p113
    %p115 = scmp.ne.s32.totalorder %s103, %s104
    %p116 = scmp.eq.s32.totalorder %s17, 1
    %p117 = por %p115, %p116
    %p119 = scmp.ne.s32.totalorder %s104, %s118
    %p120 = scmp.eq.s32.totalorder %s17, 0
    %p121 = por %p119, %p120
    %s123 = sadd.s32 %s122, 1
    %p126 = scmp.eq.s32.totalorder %s11, 1
    %p127 = scmp.ne.s32.totalorder %s122, %s124
    %p128 = scmp.eq.s32.totalorder %s11, 0
    %p129 = por %p127, %p128
    %p130 = scmp.ne.s32.totalorder %s122, %s124
    %p131 = scmp.eq.s32.totalorder %s16, 1
    %p132 = por %p130, %p131
    %p133 = scmp.ne.s32.totalorder %s124, %s125
    %p134 = scmp.eq.s32.totalorder %s16, 0
    %p135 = por %p133, %p134
    %p136 = scmp.ne.s32.totalorder %s124, %s125
    %p137 = scmp.eq.s32.totalorder %s17, 1
    %p138 = por %p136, %p137
    %p140 = scmp.ne.s32.totalorder %s125, %s139
    %p141 = scmp.eq.s32.totalorder %s17, 0
    %p142 = por %p140, %p141
    %s143 = ssub.s32 %s18, %s30
    %s144 = ssub.s32 %s19, %s26
    %s145 = sor.u32 %s143, %s144
    %p146 = scmp.eq.s32.totalorder %s145, 0
    %s148 = sadd.s32 %s147, 1
    %s149 = scalar_select %p146, %s147, %s148
    %p152 = pneg %p146
    %p153 = scmp.eq.s32.totalorder %s11, 1
    %p154 = por %p152, %p153
    %p155 = scmp.ne.s32.totalorder %s147, %s150
    %p156 = scmp.eq.s32.totalorder %s11, 0
    %p157 = por %p155, %p156
    %p158 = scmp.ne.s32.totalorder %s147, %s150
    %p159 = scmp.eq.s32.totalorder %s16, 1
    %p160 = por %p158, %p159
    %p161 = scmp.ne.s32.totalorder %s150, %s151
    %p162 = scmp.eq.s32.totalorder %s16, 0
    %p163 = por %p161, %p162
    %p164 = scmp.ne.s32.totalorder %s150, %s151
    %p165 = scmp.eq.s32.totalorder %s17, 1
    %p166 = por %p164, %p165
    %p168 = scmp.ne.s32.totalorder %s151, %s167
    %p169 = scmp.eq.s32.totalorder %s17, 0
    %p170 = por %p168, %p169
    %p171 = scmp.le.s32.totalorder 1, %s11
    %p172 = scmp.lt.s32.totalorder %s11, 3
    %p173 = pnand %p171, %p172
    %p174 = pneg %p173
    // Predicated region
    $region9: #{feed_forward_layer.1} parent=5 // pred_check
      _
    $region10: #{feed_forward_layer.1} parent=5 // pred_check_branch
      %176 = sbr.rel (%p173) target = $region12
    $region11: #{feed_forward_layer.1} parent=5 // pred_region
      %s177 = ssub.s32 %s11, 1
      // Predicated region
      $region13: #{feed_forward_layer.1} parent=11 // pred_check
        %p178 = pneg %p72
      $region14: #{feed_forward_layer.1} parent=11 // pred_check_branch
        %180 = sbr.rel (%p178) target = $region16
      $region15: #{feed_forward_layer.1} parent=11 // pred_region
        _
      $region16: #{feed_forward_layer.1} parent=11 // pred_fallthru
        _
      // Predicated region
      $region17: #{feed_forward_layer.1} parent=11 // pred_check
        %p181 = pneg %p93
      $region18: #{feed_forward_layer.1} parent=11 // pred_check_branch
        %183 = sbr.rel (%p181) target = $region20
      $region19: #{feed_forward_layer.1} parent=11 // pred_region
        _
      $region20: #{feed_forward_layer.1} parent=11 // pred_fallthru
        _
      // Predicated region
      $region21: #{feed_forward_layer.1} parent=11 // pred_check
        %p184 = pneg %p114
      $region22: #{feed_forward_layer.1} parent=11 // pred_check_branch
        %186 = sbr.rel (%p184) target = $region24
      $region23: #{feed_forward_layer.1} parent=11 // pred_region
        _
      $region24: #{feed_forward_layer.1} parent=11 // pred_fallthru
        _
      // Predicated region
      $region25: #{feed_forward_layer.1} parent=11 // pred_check
        %p187 = pneg %p135
      $region26: #{feed_forward_layer.1} parent=11 // pred_check_branch
        %189 = sbr.rel (%p187) target = $region28
      $region27: #{feed_forward_layer.1} parent=11 // pred_region
        _
      $region28: #{feed_forward_layer.1} parent=11 // pred_fallthru
        _
    $region12: #{feed_forward_layer.1} parent=5 // pred_fallthru
      _
    %p190 = scmp.lt.s32.totalorder %s11, 2
    // Predicated region
    $region29: #{feed_forward_layer.1} parent=5 // pred_check
      %p191 = pneg %p190
    $region30: #{feed_forward_layer.1} parent=5 // pred_check_branch
      %193 = sbr.rel (%p191) target = $region32
    $region31: #{feed_forward_layer.1} parent=5 // pred_region
      // Predicated region
      $region33: #{feed_forward_layer.1} parent=31 // pred_check
        %p194 = pneg %p45
      $region34: #{feed_forward_layer.1} parent=31 // pred_check_branch
        %196 = sbr.rel (%p194) target = $region36
      $region35: #{feed_forward_layer.1} parent=31 // pred_region
        %s197 = smul.u32 2, %s19
        %p198 = scmp.lt.s32.totalorder %s18, 1
        %s199 = scalar_select %p198, %s18, 1
        %p200 = scmp.lt.s32.totalorder %s197, 1
        %s201 = scalar_select %p200, %s197, 1
        %s202 = smul.addr %s199, 2
        %s203 = sadd.s32 %s201, %s202
        %s204 = smul.addr %s203, 4
        %s205 = scalar_lea.vmem %s0, %s204
        %s206 = smul.u32 2, %s19
      $region36: #{feed_forward_layer.1} parent=31 // pred_fallthru
        _
    $region32: #{feed_forward_layer.1} parent=5 // pred_fallthru
      _
    %p207 = scmp.le.s32.totalorder 1, %s11
    %p208 = scmp.lt.s32.totalorder %s11, 3
    %p209 = pnand %p207, %p208
    %p210 = pneg %p209
    // Predicated region
    $region37: #{feed_forward_layer.1} parent=5 // pred_check
      _
    $region38: #{feed_forward_layer.1} parent=5 // pred_check_branch
      %212 = sbr.rel (%p209) target = $region40
    $region39: #{feed_forward_layer.1} parent=5 // pred_region
      %s213 = ssub.s32 %s11, 1
      %s214 = smul.u32 2, %s21
      %p215 = scmp.lt.s32.totalorder %s20, 1
      %s216 = scalar_select %p215, %s20, 1
      %p217 = scmp.lt.s32.totalorder %s214, 1
      %s218 = scalar_select %p217, %s214, 1
      %s219 = smul.addr %s216, 2
      %s220 = sadd.s32 %s218, %s219
      %s221 = smul.addr %s220, 4
      %s222 = scalar_lea.vmem %s0, %s221
      %p223 = pneg %p51
      %p224 = pneg %p48
      %p225 = pneg %p72
      %p226 = pneg %p69
      %p227 = pneg %p93
      %p228 = pneg %p90
      %p229 = pneg %p114
      %p230 = pneg %p111
      %p231 = pneg %p135
      %p232 = pneg %p132
      %p233 = pneg %p163
      %p234 = pneg %p160
      %s235 = smul.u32 2, %s21
      %p236 = scmp.lt.s32.totalorder %s20, 1
      %s237 = scalar_select %p236, %s20, 1
      %p238 = scmp.lt.s32.totalorder %s235, 1
      %s239 = scalar_select %p238, %s235, 1
      %s240 = smul.addr %s237, 2
      %s241 = sadd.s32 %s239, %s240
      %s242 = smul.addr %s241, 4
      %s243 = scalar_lea.vmem %s5, %s242
      %s244 = smul.u32 2, %s21
      %p245 = scmp.lt.s32.totalorder %s20, 1
      %s246 = scalar_select %p245, %s20, 1
      %p247 = scmp.lt.s32.totalorder %s244, 1
      %s248 = scalar_select %p247, %s244, 1
      %s249 = smul.addr %s246, 2
      %s250 = sadd.s32 %s248, %s249
      %s251 = smul.addr %s250, 4
      %s252 = scalar_lea.vmem %s0, %s251
      %s253 = smul.u32 2, %s21
      %s254 = smul.u32 2, %s21
      %p255 = scmp.lt.s32.totalorder %s20, 1
      %s256 = scalar_select %p255, %s20, 1
      %p257 = scmp.lt.s32.totalorder %s254, 1
      %s258 = scalar_select %p257, %s254, 1
      %s259 = smul.addr %s256, 2
      %s260 = sadd.s32 %s258, %s259
      %s261 = smul.addr %s260, 4
      %s262 = scalar_lea.vmem %s5, %s261
      %s263 = smul.u32 2, %s21
      %v264 = vld [vmem:[%s252] sm:$0xff]
      %v265 = vld [vmem:[%s1] sm:$0xff]
      %v266 = vld [vmem:[%s1 + $0x8] sm:$0xff]
      %v267 = vld [vmem:[%s1 + $0x10] sm:$0xff]
      %v268 = vld [vmem:[%s1 + $0x18] sm:$0xff]
      %v269 = vld [vmem:[%s2] sm:$0xff]
      %v270 = vld [vmem:[%s2 + $0x8] sm:$0xff]
      %v271 = vld [vmem:[%s2 + $0x10] sm:$0xff]
      %v272 = vld [vmem:[%s2 + $0x18] sm:$0xff]
      %274 = vset.pattern.permute.xlu0 0
      %275 = vperm.xlu0 %274, %v269
      %v276 = vpop.permute.xlu0 %275
      %279 = vset.pattern.permute.xlu0 0
      %280 = vperm.xlu0 %279, %v270
      %v281 = vpop.permute.xlu0 %280
      %284 = vset.pattern.permute.xlu0 0
      %285 = vperm.xlu0 %284, %v271
      %v286 = vpop.permute.xlu0 %285
      %289 = vset.pattern.permute.xlu0 0
      %290 = vperm.xlu0 %289, %v272
      %v291 = vpop.permute.xlu0 %290
      %v294 = vcombine.high %v264, %v264
      %vm295 = vcmask 31744
      %v297 = vsel %vm295, %v265, 0
      %v300 = vsel %vm295, %v266, 0
      %v303 = vsel %vm295, %v267, 0
      %v306 = vsel %vm295, %v268, 0
      %vm308 = vcmask 1043456
      %v309 = vsel %vm308, %v264, 0
      %v311 = vsel %vm308, %v294, 0
      %313 = vmatprep.subr.mxu0 %v311
      %314 = vmatpush1.msra.mxu0 %v309
      %315 = vmatprep.subr.mxu0 0.0
      %316 = vmatpush1.msra.mxu0 0.0
      %317 = vmatprep.subr.mxu0 0.0
      %318 = vmatpush1.msra.mxu0 0.0
      %319 = vmatprep.subr.mxu0 0.0
      %320 = vmatpush1.msra.mxu0 0.0
      %321 = vmatprep.subr.mxu0 0.0
      %322 = vmatpush1.msra.mxu0 0.0
      %323 = vmatprep.subr.mxu0 0.0
      %324 = vmatpush1.msra.mxu0 0.0
      %325 = vmatprep.subr.mxu0 0.0
      %326 = vmatpush1.msra.mxu0 0.0
      %327 = vmatprep.subr.mxu0 0.0
      %328 = vmatpush1.msra.mxu0 0.0
      %329 = vmatprep.subr.mxu0 0.0
      %330 = vmatpush1.msra.mxu0 0.0
      %331 = vmatprep.subr.mxu0 0.0
      %332 = vmatpush1.msra.mxu0 0.0
      %333 = vmatprep.subr.mxu0 0.0
      %334 = vmatpush1.msra.mxu0 0.0
      %335 = vmatprep.subr.mxu0 0.0
      %336 = vmatpush1.msra.mxu0 0.0
      %337 = vmatprep.subr.mxu0 0.0
      %338 = vmatpush1.msra.mxu0 0.0
      %339 = vmatprep.subr.mxu0 0.0
      %340 = vmatpush1.msra.mxu0 0.0
      %341 = vmatprep.subr.mxu0 0.0
      %342 = vmatpush1.msra.mxu0 0.0
      %343 = vmatprep.subr.mxu0 0.0
      %344 = vmatpush1.msra.mxu0 0.0
      %345 = vmatprep.subr.mxu0 0.0
      %346 = vmatpush1.msra.mxu0 0.0
      %347 = vmatprep.subr.mxu0 0.0
      %348 = vmatpush1.msra.mxu0 0.0
      %349 = vmatprep.subr.mxu0 0.0
      %350 = vmatpush1.msra.mxu0 0.0
      %351 = vmatprep.subr.mxu0 0.0
      %352 = vmatpush1.msra.mxu0 0.0
      %353 = vmatprep.subr.mxu0 0.0
      %354 = vmatpush1.msra.mxu0 0.0
      %355 = vmatprep.subr.mxu0 0.0
      %356 = vmatpush1.msra.mxu0 0.0
      %357 = vmatprep.subr.mxu0 0.0
      %358 = vmatpush1.msra.mxu0 0.0
      %359 = vmatprep.subr.mxu0 0.0
      %360 = vmatpush1.msra.mxu0 0.0
      %361 = vmatprep.subr.mxu0 0.0
      %362 = vmatpush1.msra.mxu0 0.0
      %363 = vmatprep.subr.mxu0 0.0
      %364 = vmatpush1.msra.mxu0 0.0
      %365 = vmatprep.subr.mxu0 0.0
      %366 = vmatpush1.msra.mxu0 0.0
      %367 = vmatprep.subr.mxu0 0.0
      %368 = vmatpush1.msra.mxu0 0.0
      %369 = vmatprep.subr.mxu0 0.0
      %370 = vmatpush1.msra.mxu0 0.0
      %371 = vmatprep.subr.mxu0 0.0
      %372 = vmatpush1.msra.mxu0 0.0
      %373 = vmatprep.subr.mxu0 0.0
      %374 = vmatpush1.msra.mxu0 0.0
      %375 = vmatprep.subr.mxu0 0.0
      %376 = vmatpush1.msra.mxu0 0.0
      %377 = vmatprep.mubr.f32.mxu0 0.0
      %378 = vmatmul.mubr.f32.gmra.mrb[0].mxu0 %v297
      %v379 = vpop.f32.mrb[0].mxu0
      %v380 = vadd.f32 %v276, %v379
      %v381 = vpop.f32.mrb[0].mxu0
      %v382 = vadd.f32 %v276, %v381
      %383 = vmatprep.mubr.f32.mxu0 0.0
      %384 = vmatmul.mubr.f32.gmra.mrb[0].mxu0 %v300
      %v385 = vpop.f32.mrb[0].mxu0
      %v386 = vadd.f32 %v281, %v385
      %v387 = vpop.f32.mrb[0].mxu0
      %v388 = vadd.f32 %v281, %v387
      %389 = vmatprep.mubr.f32.mxu0 0.0
      %390 = vmatmul.mubr.f32.gmra.mrb[0].mxu0 %v303
      %v391 = vpop.f32.mrb[0].mxu0
      %v392 = vadd.f32 %v286, %v391
      %v393 = vpop.f32.mrb[0].mxu0
      %v394 = vadd.f32 %v286, %v393
      %395 = vmatprep.mubr.f32.mxu0 0.0
      %396 = vmatmul.mubr.f32.gmra.mrb[0].mxu0 %v306
      %v397 = vpop.f32.mrb[0].mxu0
      %v398 = vadd.f32 %v291, %v397
      %v399 = vpop.f32.mrb[0].mxu0
      %v400 = vadd.f32 %v291, %v399
      %401 = vdwg.mxu0
      %v402 = vmax.f32 %v380, 0.0
      %v403 = vmax.f32 %v382, 0.0
      %v404 = vmax.f32 %v386, 0.0
      %v405 = vmax.f32 %v388, 0.0
      %v406 = vmax.f32 %v392, 0.0
      %v407 = vmax.f32 %v394, 0.0
      %v408 = vmax.f32 %v398, 0.0
      %v409 = vmax.f32 %v400, 0.0
      %v410 = vld [vmem:[%s3] sm:$0xf]
      %v411 = vld [vmem:[%s4] sm:$0xf]
      %413 = vset.pattern.permute.xlu0 0
      %414 = vperm.xlu0 %413, %v411
      %v415 = vpop.permute.xlu0 %414
      %vm417 = vcmask 261120
      %v419 = vsel %vm417, %v410, 0
      %421 = vmatprep.subr.mxu0 %v403
      %422 = vmatpush1.msra.mxu0 %v402
      %423 = vmatprep.subr.mxu0 %v405
      %424 = vmatpush1.msra.mxu0 %v404
      %425 = vmatprep.subr.mxu0 %v407
      %426 = vmatpush1.msra.mxu0 %v406
      %427 = vmatprep.subr.mxu0 %v409
      %428 = vmatpush1.msra.mxu0 %v408
      %429 = vmatprep.subr.mxu0 0.0
      %430 = vmatpush1.msra.mxu0 0.0
      %431 = vmatprep.subr.mxu0 0.0
      %432 = vmatpush1.msra.mxu0 0.0
      %433 = vmatprep.subr.mxu0 0.0
      %434 = vmatpush1.msra.mxu0 0.0
      %435 = vmatprep.subr.mxu0 0.0
      %436 = vmatpush1.msra.mxu0 0.0
      %437 = vmatprep.subr.mxu0 0.0
      %438 = vmatpush1.msra.mxu0 0.0
      %439 = vmatprep.subr.mxu0 0.0
      %440 = vmatpush1.msra.mxu0 0.0
      %441 = vmatprep.subr.mxu0 0.0
      %442 = vmatpush1.msra.mxu0 0.0
      %443 = vmatprep.subr.mxu0 0.0
      %444 = vmatpush1.msra.mxu0 0.0
      %445 = vmatprep.subr.mxu0 0.0
      %446 = vmatpush1.msra.mxu0 0.0
      %447 = vmatprep.subr.mxu0 0.0
      %448 = vmatpush1.msra.mxu0 0.0
      %449 = vmatprep.subr.mxu0 0.0
      %450 = vmatpush1.msra.mxu0 0.0
      %451 = vmatprep.subr.mxu0 0.0
      %452 = vmatpush1.msra.mxu0 0.0
      %453 = vmatprep.subr.mxu0 0.0
      %454 = vmatpush1.msra.mxu0 0.0
      %455 = vmatprep.subr.mxu0 0.0
      %456 = vmatpush1.msra.mxu0 0.0
      %457 = vmatprep.subr.mxu0 0.0
      %458 = vmatpush1.msra.mxu0 0.0
      %459 = vmatprep.subr.mxu0 0.0
      %460 = vmatpush1.msra.mxu0 0.0
      %461 = vmatprep.subr.mxu0 0.0
      %462 = vmatpush1.msra.mxu0 0.0
      %463 = vmatprep.subr.mxu0 0.0
      %464 = vmatpush1.msra.mxu0 0.0
      %465 = vmatprep.subr.mxu0 0.0
      %466 = vmatpush1.msra.mxu0 0.0
      %467 = vmatprep.subr.mxu0 0.0
      %468 = vmatpush1.msra.mxu0 0.0
      %469 = vmatprep.subr.mxu0 0.0
      %470 = vmatpush1.msra.mxu0 0.0
      %471 = vmatprep.subr.mxu0 0.0
      %472 = vmatpush1.msra.mxu0 0.0
      %473 = vmatprep.subr.mxu0 0.0
      %474 = vmatpush1.msra.mxu0 0.0
      %475 = vmatprep.subr.mxu0 0.0
      %476 = vmatpush1.msra.mxu0 0.0
      %477 = vmatprep.subr.mxu0 0.0
      %478 = vmatpush1.msra.mxu0 0.0
      %479 = vmatprep.subr.mxu0 0.0
      %480 = vmatpush1.msra.mxu0 0.0
      %481 = vmatprep.subr.mxu0 0.0
      %482 = vmatpush1.msra.mxu0 0.0
      %483 = vmatprep.subr.mxu0 0.0
      %484 = vmatpush1.msra.mxu0 0.0
      %485 = vmatprep.mubr.f32.mxu0 0.0
      %486 = vmatmul.mubr.f32.gmra.mrb[0].mxu0 %v419
      %v487 = vpop.f32.mrb[0].mxu0
      %v488 = vadd.f32 %v415, %v487
      %v489 = vpop.f32.mrb[0].mxu0
      %v490 = vadd.f32 %v415, %v489
      %491 = vdwg.mxu0
      %v493 = vadd.f32 %v488, %v264
      %v494 = vadd.f32 %v490, %v294
      %v497 = vcombine.low %v493, %v494
      %499 = vst [vmem:[%s262] sm:$0xff] %v497
      %s500 = smul.u32 2, %s21
      %p501 = scmp.lt.s32.totalorder %s20, 1
      %s502 = scalar_select %p501, %s20, 1
      %p503 = scmp.lt.s32.totalorder %s500, 1
      %s504 = scalar_select %p503, %s500, 1
      %s505 = smul.addr %s502, 2
      %s506 = sadd.s32 %s504, %s505
      %s507 = smul.addr %s506, 4
      %s508 = scalar_lea.vmem %s5, %s507
      // Predicated region
      $region41: #{feed_forward_layer.1} parent=39 // pred_check
        %p509 = pneg %p160
      $region42: #{feed_forward_layer.1} parent=39 // pred_check_branch
        %511 = sbr.rel (%p509) target = $region44
      $region43: #{feed_forward_layer.1} parent=39 // pred_region
        %s512 = smul.u32 2, %s21
      $region44: #{feed_forward_layer.1} parent=39 // pred_fallthru
        _
    $region40: #{feed_forward_layer.1} parent=5 // pred_fallthru
      _
    %p513 = scmp.le.s32.totalorder 2, %s11
    // Predicated region
    $region45: #{feed_forward_layer.1} parent=5 // pred_check
      %p514 = pneg %p513
    $region46: #{feed_forward_layer.1} parent=5 // pred_check_branch
      %516 = sbr.rel (%p514) target = $region48
    $region47: #{feed_forward_layer.1} parent=5 // pred_region
      %s517 = ssub.s32 %s11, 2
      // Predicated region
      $region49: #{feed_forward_layer.1} parent=47 // pred_check
        %p518 = pneg %p166
      $region50: #{feed_forward_layer.1} parent=47 // pred_check_branch
        %520 = sbr.rel (%p518) target = $region52
      $region51: #{feed_forward_layer.1} parent=47 // pred_region
        %s521 = smul.u32 2, %s23
        %p522 = scmp.lt.s32.totalorder %s22, 1
        %s523 = scalar_select %p522, %s22, 1
        %p524 = scmp.lt.s32.totalorder %s521, 1
        %s525 = scalar_select %p524, %s521, 1
        %s526 = smul.addr %s523, 2
        %s527 = sadd.s32 %s525, %s526
        %s528 = smul.addr %s527, 4
        %s529 = scalar_lea.vmem %s5, %s528
      $region52: #{feed_forward_layer.1} parent=47 // pred_fallthru
        _
    $region48: #{feed_forward_layer.1} parent=5 // pred_fallthru
      _
  $region6: #{feed_forward_layer.1} parent=0 // loop_footer
    %s15 = sadd.s32 1, %s11
  $region7: #{feed_forward_layer.1} parent=0 // loop_footer_branch
    %10 = sbr.rel target = $region3
  $region8: #{feed_forward_layer.1} parent=0 // loop_exit
    _

</llo_original>
